<compile_context>
chip_gen: v7x
topology: tpu7x:2x2x1
jax: 0.10.0
libtpu: 0.0.40
codegen_flags: <defaults>
</compile_context>

<pallas_src>
import functools
import math

import jax
import jax.numpy as jnp
from jax.experimental import pallas as pl
from jax.experimental.pallas import tpu as pltpu


# ----------------------------------------------------------------------------
# Per-chip configuration (tile sizes, VMEM budget, pipeline depth)
# ----------------------------------------------------------------------------
def _tpu_config():
    vmem = 128 << 20            # v5e / v6e default
    chip = ""
    try:
        info = pltpu.get_tpu_info()
        vmem = int(getattr(info, "vmem_capacity_bytes", vmem) or vmem)
        chip = str(getattr(info, "chip_version", "")
                   or getattr(info, "version", "")
                   or getattr(info, "name", "")).lower()
    except Exception:            # no TPU visible at trace time -> safe defaults
        pass
    small_vmem = vmem <= (96 << 20)          # v7x-class (64 MiB per TensorCore)
    is_v5 = "v5" in chip
    return {
        "vmem_cap": vmem,
        # Projection tiles: large on 128 MiB parts, smaller on v7x.
        "tm": 256 if small_vmem else 512,
        "tn": 256 if small_vmem else 512,
        "tk": 512,
        # Flash-attention tiles: halve kv tile on v7x so double-buffered blocks
        # plus scratch stay well inside 64 MiB.
        "tq": 256,
        "tkv": 256 if small_vmem else 512,
        # v5e: deeper K/V + weight prefetch hides the lower HBM bandwidth.
        "input_buffers": 3 if is_v5 else 2,
    }


_CFG = _tpu_config()


def _fit(dim, target, align=1):
    """Largest tile <= target that divides `dim` and is a multiple of `align`
    (TPU (8,128) block legality). Falls back to the full dimension, which is
    always legal.  TODO(synk): pad ragged dims instead of full-dim fallback."""
    for cand in range(min(target, dim), 0, -1):
        if dim % cand == 0 and cand % align == 0:
            return cand
    return dim


def _vmem_limit(step_bytes, scratch_bytes, buffers):
    """Scoped-VMEM limit sized from the actual block working set (default
    scoped limit is only 16/32 MiB, far below physical VMEM)."""
    need = buffers * step_bytes + scratch_bytes + (4 << 20)
    cap = int(_CFG["vmem_cap"] * 0.9)
    return int(min(cap, max(need, 32 << 20)))


def _spec(block_shape, index_map, buffers=2):
    """BlockSpec with optional deeper pipelining (v5e); degrades gracefully."""
    if buffers > 2:
        try:
            return pl.BlockSpec(block_shape, index_map,
                                pipeline_mode=pl.Buffered(buffers))
        except TypeError:        # pipeline_mode unsupported in this JAX version
            pass
    return pl.BlockSpec(block_shape, index_map)


# ----------------------------------------------------------------------------
# Kernel 1: tiled matmul + bias (plain and fused-QKV projections)
# ----------------------------------------------------------------------------
def _matmul_bias_kernel(x_ref, w_ref, b_ref, o_ref, acc_ref, *, k_axis):
    k = pl.program_id(k_axis)

    @pl.when(k == 0)
    def _():
        acc_ref[...] = jnp.zeros_like(acc_ref)

    # bf16 operands (by default), f32 accumulation on the MXU.
    acc_ref[...] += jnp.dot(x_ref[...], w_ref[...],
                            preferred_element_type=jnp.float32)

    @pl.when(k == pl.num_programs(k_axis) - 1)
    def _():
        o_ref[...] = (acc_ref[...] + b_ref[...]).astype(o_ref.dtype)


def linear(x2d, w, b, *, compute_dtype=jnp.bfloat16, out_dtype=None):
    """y = x2d @ w + b, tiled / pipelined on the MXU.  x2d: (M,K), w: (K,N)."""
    M, K = x2d.shape
    N = w.shape[1]
    out_dtype = x2d.dtype if out_dtype is None else out_dtype
    tm = _fit(M, _CFG["tm"], 8)
    tn = _fit(N, _CFG["tn"], 128)
    tk = _fit(K, _CFG["tk"], 128)
    grid = (M // tm, N // tn, K // tk)

    xc = x2d.astype(compute_dtype)
    wc = w.astype(compute_dtype)
    bf = b.reshape(1, N).astype(jnp.float32)

    itm = jnp.dtype(compute_dtype).itemsize
    step_bytes = (tm * tk + tk * tn + tn) * itm + tm * tn * jnp.dtype(out_dtype).itemsize
    scratch_bytes = tm * tn * 4
    cost = pl.CostEstimate(
        flops=2 * M * N * K, transcendentals=0,
        bytes_accessed=(M * K * (N // tn) + K * N * (M // tm) + M * N + N) * itm)

    return pl.pallas_call(
        functools.partial(_matmul_bias_kernel, k_axis=2),
        out_shape=jax.ShapeDtypeStruct((M, N), out_dtype),
        grid_spec=pltpu.PrefetchScalarGridSpec(
            num_scalar_prefetch=0,
            grid=grid,
            in_specs=[
                pl.BlockSpec((tm, tk), lambda i, j, k: (i, k)),
                _spec((tk, tn), lambda i, j, k: (k, j), _CFG["input_buffers"]),
                pl.BlockSpec((1, tn), lambda i, j, k: (0, j)),
            ],
            out_specs=pl.BlockSpec((tm, tn), lambda i, j, k: (i, j)),
            scratch_shapes=[pltpu.VMEM((tm, tn), jnp.float32)],
        ),
        compiler_params=pltpu.CompilerParams(
            dimension_semantics=("parallel", "parallel", "arbitrary"),
            vmem_limit_bytes=_vmem_limit(step_bytes, scratch_bytes,
                                         _CFG["input_buffers"])),
        cost_estimate=cost,
    )(xc, wc, bf)


def fused_qkv_linear(x2d, w3, b3, *, compute_dtype=jnp.bfloat16):
    """Fused Q/K/V projection: x2d (M,K), w3 (3,K,D), b3 (3,1,D) -> (3,M,D)."""
    M, K = x2d.shape
    D = w3.shape[2]
    tm = _fit(M, _CFG["tm"], 8)
    tn = _fit(D, _CFG["tn"], 128)
    tk = _fit(K, _CFG["tk"], 128)
    grid = (3, M // tm, D // tn, K // tk)

    xc = x2d.astype(compute_dtype)
    wc = w3.astype(compute_dtype)
    bf = b3.astype(jnp.float32)

    itm = jnp.dtype(compute_dtype).itemsize
    step_bytes = (tm * tk + tk * tn + tn) * itm + tm * tn * itm
    scratch_bytes = tm * tn * 4
    cost = pl.CostEstimate(
        flops=2 * M * 3 * D * K, transcendentals=0,
        bytes_accessed=(3 * M * K * (D // tn) + 3 * K * D * (M // tm)
                        + 3 * M * D + 3 * D) * itm)

    return pl.pallas_call(
        functools.partial(_matmul_bias_kernel, k_axis=3),
        out_shape=jax.ShapeDtypeStruct((3, M, D), compute_dtype),
        grid_spec=pltpu.PrefetchScalarGridSpec(
            num_scalar_prefetch=0,
            grid=grid,
            in_specs=[
                pl.BlockSpec((tm, tk), lambda g, i, j, k: (i, k)),
                _spec((None, tk, tn), lambda g, i, j, k: (g, k, j),
                      _CFG["input_buffers"]),
                pl.BlockSpec((None, 1, tn), lambda g, i, j, k: (g, 0, j)),
            ],
            out_specs=pl.BlockSpec((None, tm, tn), lambda g, i, j, k: (g, i, j)),
            scratch_shapes=[pltpu.VMEM((tm, tn), jnp.float32)],
        ),
        compiler_params=pltpu.CompilerParams(
            dimension_semantics=("parallel", "parallel", "parallel", "arbitrary"),
            vmem_limit_bytes=_vmem_limit(step_bytes, scratch_bytes,
                                         _CFG["input_buffers"])),
        cost_estimate=cost,
    )(xc, wc, bf)


# ----------------------------------------------------------------------------
# Kernel 2: flash attention, heads on a grid axis, online softmax over kv
# ----------------------------------------------------------------------------
def _flash_mha_kernel(q_ref, k_ref, v_ref, o_ref, m_ref, l_ref, acc_ref):
    ki = pl.program_id(3)

    @pl.when(ki == 0)
    def _():
        m_ref[...] = jnp.full_like(m_ref, -jnp.inf)
        l_ref[...] = jnp.zeros_like(l_ref)
        acc_ref[...] = jnp.zeros_like(acc_ref)

    # TODO(synk): optional attention mask not implemented (mask=None path only).
    # 1/sqrt(d_k) is folded into W_q/b_q, so there is no in-kernel scaling.
    s = jax.lax.dot_general(q_ref[...], k_ref[...], (((1,), (1,)), ((), ())),
                            preferred_element_type=jnp.float32)     # (tq, tkv)

    m_prev = m_ref[...]
    m_new = jnp.maximum(m_prev, jnp.max(s, axis=-1, keepdims=True))
    alpha = jnp.exp(m_prev - m_new)
    p = jnp.exp(s - m_new)                                           # (tq, tkv)
    l_ref[...] = alpha * l_ref[...] + jnp.sum(p, axis=-1, keepdims=True)
    acc_ref[...] = alpha * acc_ref[...] + jnp.dot(
        p.astype(v_ref.dtype), v_ref[...], preferred_element_type=jnp.float32)
    m_ref[...] = m_new

    @pl.when(ki == pl.num_programs(3) - 1)
    def _():
        inv_l = pl.reciprocal(l_ref[...], approx=True)   # EUP slot, ~free
        o_ref[...] = (acc_ref[...] * inv_l).astype(o_ref.dtype)


def flash_mha(q_src, k_src, v_src, groups=(0, 0, 0)):
    """q/k/v sources: (G, B, H, S, d_k); `groups` selects which leading index
    holds q / k / v (lets the fused QKV buffer be passed three times with no
    XLA-side slicing).  Output: (B, H, Sq, d_k)."""
    _, B, H, Sq, dk = q_src.shape
    Skv = k_src.shape[3]
    tq = _fit(Sq, _CFG["tq"], 8)
    tkv = _fit(Skv, _CFG["tkv"], 8)
    gq, gk, gv = groups
    grid = (B, H, Sq // tq, Skv // tkv)

    itm = jnp.dtype(q_src.dtype).itemsize
    step_bytes = (tq * dk + 2 * tkv * dk + tq * dk) * itm
    scratch_bytes = (2 * tq * 128 + tq * dk) * 4     # m, l (lane-padded), acc
    cost = pl.CostEstimate(
        flops=4 * B * H * Sq * Skv * dk,
        transcendentals=B * H * Sq * Skv,
        bytes_accessed=(2 * B * H * Sq * dk
                        + 2 * B * H * Skv * dk * (Sq // tq)) * itm)

    return pl.pallas_call(
        _flash_mha_kernel,
        out_shape=jax.ShapeDtypeStruct((B, H, Sq, dk), q_src.dtype),
        grid_spec=pltpu.PrefetchScalarGridSpec(
            num_scalar_prefetch=0,
            grid=grid,
            in_specs=[
                pl.BlockSpec((None, None, None, tq, dk),
                             lambda b, h, qi, ki: (gq, b, h, qi, 0)),
                _spec((None, None, None, tkv, dk),
                      lambda b, h, qi, ki: (gk, b, h, ki, 0),
                      _CFG["input_buffers"]),
                _spec((None, None, None, tkv, dk),
                      lambda b, h, qi, ki: (gv, b, h, ki, 0),
                      _CFG["input_buffers"]),
            ],
            out_specs=pl.BlockSpec((None, None, tq, dk),
                                   lambda b, h, qi, ki: (b, h, qi, 0)),
            scratch_shapes=[
                pltpu.VMEM((tq, 1), jnp.float32),    # running max m
                pltpu.VMEM((tq, 1), jnp.float32),    # running sum l
                pltpu.VMEM((tq, dk), jnp.float32),   # unnormalized accumulator
            ],
        ),
        compiler_params=pltpu.CompilerParams(
            dimension_semantics=("parallel", "parallel", "parallel", "arbitrary"),
            vmem_limit_bytes=_vmem_limit(step_bytes, scratch_bytes,
                                         _CFG["input_buffers"])),
        cost_estimate=cost,
    )(q_src, k_src, v_src)


# ----------------------------------------------------------------------------
# Parameters & module forward
# ----------------------------------------------------------------------------
def init_mha_params(key, d_model):
    """Shapes match nn.Linear(d_model, d_model); weights stored (d_in, d_out)."""
    keys = jax.random.split(key, 8)
    bound = 1.0 / math.sqrt(d_model)

    def lin(kw, kb):
        w = jax.random.uniform(kw, (d_model, d_model), jnp.float32, -bound, bound)
        b = jax.random.uniform(kb, (d_model,), jnp.float32, -bound, bound)
        return w, b

    return {"W_q": lin(keys[0], keys[1]), "W_k": lin(keys[2], keys[3]),
            "W_v": lin(keys[4], keys[5]), "W_o": lin(keys[6], keys[7])}


def prepare_params(params, num_heads):
    """One-time parameter prep (hoisted out of the forward):
       * fold 1/sqrt(d_k) into W_q / b_q,
       * pre-stack the fused (3, D, D) QKV weight for the self-attention path."""
    d_model = params["W_q"][0].shape[0]
    d_k = d_model // num_heads
    scale = 1.0 / math.sqrt(d_k)
    wq, bq = params["W_q"]
    wk, bk = params["W_k"]
    wv, bv = params["W_v"]
    wq, bq = wq * scale, bq * scale
    return {
        "W_q": (wq, bq), "W_k": (wk, bk), "W_v": (wv, bv), "W_o": params["W_o"],
        "W_qkv": jnp.stack([wq, wk, wv], axis=0),
        "b_qkv": jnp.stack([bq, bk, bv], axis=0)[:, None, :],
    }


def mha_forward(prepared, Q, K, V, num_heads, mask=None,
                compute_dtype=jnp.bfloat16):
    assert mask is None, "TODO(synk): attention mask not implemented"
    B, Sq, D = Q.shape
    Skv = K.shape[1]
    assert D % num_heads == 0, "d_model must be divisible by num_heads"
    d_k = D // num_heads
    out_dtype = Q.dtype

    def split_heads(y2d, seq):
        # (B*seq, D) -> (B, H, seq, d_k); mirrors the module's split_heads.
        return y2d.reshape(B, seq, num_heads, d_k).transpose(0, 2, 1, 3)

    if Q is K and K is V:
        # Self-attention fast path: single fused QKV projection; the (3, ...)
        # buffer is read three times by the attention kernel via `groups`.
        qkv = fused_qkv_linear(Q.reshape(B * Sq, D), prepared["W_qkv"],
                               prepared["b_qkv"], compute_dtype=compute_dtype)
        qkv = qkv.reshape(3, B, Sq, num_heads, d_k).transpose(0, 1, 3, 2, 4)
        attn = flash_mha(qkv, qkv, qkv, groups=(0, 1, 2))
    else:
        def proj(x, name, seq):
            w, b = prepared[name]
            y = linear(x.reshape(B * seq, D), w, b,
                       compute_dtype=compute_dtype, out_dtype=compute_dtype)
            return split_heads(y, seq)[None]            # (1, B, H, seq, d_k)

        attn = flash_mha(proj(Q, "W_q", Sq), proj(K, "W_k", Skv),
                         proj(V, "W_v", Skv), groups=(0, 0, 0))

    combined = attn.transpose(0, 2, 1, 3).reshape(B * Sq, D)   # combine_heads
    w_o, b_o = prepared["W_o"]
    out = linear(combined, w_o, b_o, compute_dtype=compute_dtype,
                 out_dtype=out_dtype)
    return out.reshape(B, Sq, D)


# ----------------------------------------------------------------------------
# Pure-JAX reference
# ----------------------------------------------------------------------------
def mha_reference(params, Q, K, V, num_heads):
    B, Sq, d_model = Q.shape
    d_k = d_model // num_heads

    def lin(x, name):
        w, b = params[name]
        return x @ w + b

    def split(x):
        s = x.shape[1]
        return x.reshape(B, s, num_heads, d_k).transpose(0, 2, 1, 3)

    q, k, v = split(lin(Q, "W_q")), split(lin(K, "W_k")), split(lin(V, "W_v"))
    scores = jnp.einsum("bhqd,bhkd->bhqk", q, k) / math.sqrt(d_k)
    probs = jax.nn.softmax(scores, axis=-1)
    attn = jnp.einsum("bhqk,bhkd->bhqd", probs, v)
    combined = attn.transpose(0, 2, 1, 3).reshape(B, Sq, d_model)
    w_o, b_o = params["W_o"]
    return combined @ w_o + b_o


if __name__ == "__main__":
    B, S, d_model, num_heads = 2, 8, 32, 4

    key = jax.random.PRNGKey(0)
    kq, kk, kv, kp = jax.random.split(key, 4)
    Q = jax.random.normal(kq, (B, S, d_model), jnp.float32)
    K = jax.random.normal(kk, (B, S, d_model), jnp.float32)
    V = jax.random.normal(kv, (B, S, d_model), jnp.float32)

    params = init_mha_params(kp, d_model)
    prepared = prepare_params(params, num_heads)

    # 1) General (cross-attention) path in f32 compute: tight numerical check
    #    (only approximation is the EUP approximate reciprocal).
    out = jax.block_until_ready(
        mha_forward(prepared, Q, K, V, num_heads, compute_dtype=jnp.float32))
    ref = mha_reference(params, Q, K, V, num_heads)
    assert out.shape == (B, S, d_model), out.shape
    assert jnp.allclose(out, ref, atol=5e-3, rtol=5e-3), "f32 general path mismatch"

    # 2) Self-attention fast path with the default bf16 MXU operands
    #    (f32 accumulation); tolerance reflects bf16 input rounding.
    out_sa = jax.block_until_ready(mha_forward(prepared, Q, Q, Q, num_heads))
    ref_sa = mha_reference(params, Q, Q, Q, num_heads)
    max_err = float(jnp.max(jnp.abs(out_sa - ref_sa)))
    assert jnp.allclose(out_sa, ref_sa, atol=5e-2, rtol=5e-2), (
        "bf16 fused path mismatch, max abs err %.4g" % max_err)

    print("KERNEL_OK")
</pallas_src>

<mosaic_0001>
module attributes {stable_mosaic.version = 11 : i64} {
  func.func @_matmul_bias_kernel(%arg0: i32, %arg1: i32, %arg2: i32, %arg3: memref<16x32xf32, #tpu.memory_space<vmem>>, %arg4: memref<32x32xf32, #tpu.memory_space<vmem>>, %arg5: memref<1x32xf32, #tpu.memory_space<vmem>>, %arg6: memref<16x32xf32, #tpu.memory_space<vmem>>, %arg7: memref<16x32xf32, #tpu.memory_space<vmem>>) attributes {dimension_semantics = [#tpu.dimension_semantics<parallel>, #tpu.dimension_semantics<parallel>, #tpu.dimension_semantics<arbitrary>], iteration_bounds = array<i64: 1, 1, 1>, scalar_prefetch = 0 : i64, scratch_operands = 1 : i64, tpu.core_type = #tpu.core_type<tc>, window_params = [{transform_indices = @transform_0, window_bounds = array<i64: 16, 32>}, {transform_indices = @transform_1, window_bounds = array<i64: 32, 32>}, {transform_indices = @transform_2, window_bounds = array<i64: 1, 32>}, {transform_indices = @transform_3, window_bounds = array<i64: 16, 32>}]} {
    %c0_i32 = arith.constant 0 : i32
    %0 = arith.cmpi eq, %arg2, %c0_i32 : i32
    %1 = arith.extui %0 : i1 to i32
    %c0_i32_0 = arith.constant 0 : i32
    %2 = arith.cmpi ne, %1, %c0_i32_0 : i32
    scf.if %2 {
      %cst_10 = arith.constant 0.000000e+00 : f32
      %12 = vector.broadcast %cst_10 : f32 to vector<16x32xf32>
      %c0_11 = arith.constant 0 : index
      %c0_12 = arith.constant 0 : index
      %13 = vector.load %arg7[%c0_11, %c0_12] : memref<16x32xf32, #tpu.memory_space<vmem>>, vector<16x32xf32>
      tpu.vector_store %arg7[%c0_11, %c0_12], %12 {strides = array<i32>} : memref<16x32xf32, #tpu.memory_space<vmem>>, vector<16x32xf32>,
    } else {
    }
    %c0 = arith.constant 0 : index
    %c0_1 = arith.constant 0 : index
    %3 = vector.load %arg7[%c0, %c0_1] : memref<16x32xf32, #tpu.memory_space<vmem>>, vector<16x32xf32>
    %c0_2 = arith.constant 0 : index
    %c0_3 = arith.constant 0 : index
    %4 = vector.load %arg3[%c0_2, %c0_3] : memref<16x32xf32, #tpu.memory_space<vmem>>, vector<16x32xf32>
    %c0_4 = arith.constant 0 : index
    %c0_5 = arith.constant 0 : index
    %5 = vector.load %arg4[%c0_4, %c0_5] : memref<32x32xf32, #tpu.memory_space<vmem>>, vector<32x32xf32>
    %cst = arith.constant dense<0.000000e+00> : vector<16x32xf32>
    %6 = tpu.matmul %4, %5, %cst {dimension_numbers = #tpu.dot_dimension_numbers<[1], [0], [0], [1], [0, 0, 1, 1], [], []>} : vector<16x32xf32>, vector<32x32xf32>, vector<16x32xf32> -> vector<16x32xf32>
    %7 = arith.addf %3, %6 : vector<16x32xf32>
    %c0_6 = arith.constant 0 : index
    %c0_7 = arith.constant 0 : index
    %8 = vector.load %arg7[%c0_6, %c0_7] : memref<16x32xf32, #tpu.memory_space<vmem>>, vector<16x32xf32>
    tpu.vector_store %arg7[%c0_6, %c0_7], %7 {strides = array<i32>} : memref<16x32xf32, #tpu.memory_space<vmem>>, vector<16x32xf32>,
    %c0_i32_8 = arith.constant 0 : i32
    %9 = arith.cmpi eq, %arg2, %c0_i32_8 : i32
    %10 = arith.extui %9 : i1 to i32
    %c0_i32_9 = arith.constant 0 : i32
    %11 = arith.cmpi ne, %10, %c0_i32_9 : i32
    scf.if %11 {
      %c0_10 = arith.constant 0 : index
      %c0_11 = arith.constant 0 : index
      %12 = vector.load %arg7[%c0_10, %c0_11] : memref<16x32xf32, #tpu.memory_space<vmem>>, vector<16x32xf32>
      %c0_12 = arith.constant 0 : index
      %c0_13 = arith.constant 0 : index
      %13 = vector.load %arg5[%c0_12, %c0_13] : memref<1x32xf32, #tpu.memory_space<vmem>>, vector<1x32xf32>
      %14 = vector.broadcast %13 : vector<1x32xf32> to vector<16x32xf32>
      %15 = arith.addf %12, %14 : vector<16x32xf32>
      %c0_14 = arith.constant 0 : index
      %c0_15 = arith.constant 0 : index
      %16 = vector.load %arg6[%c0_14, %c0_15] : memref<16x32xf32, #tpu.memory_space<vmem>>, vector<16x32xf32>
      tpu.vector_store %arg6[%c0_14, %c0_15], %15 {strides = array<i32>} : memref<16x32xf32, #tpu.memory_space<vmem>>, vector<16x32xf32>,
    } else {
    }
    return
  }
  func.func @transform_0(%arg0: i32, %arg1: i32, %arg2: i32) -> (i32, i32) {
    %c0_i32 = arith.constant 0 : i32
    return %arg0, %arg2 : i32, i32
  }
  func.func @transform_1(%arg0: i32, %arg1: i32, %arg2: i32) -> (i32, i32) {
    %c0_i32 = arith.constant 0 : i32
    return %arg2, %arg1 : i32, i32
  }
  func.func @transform_2(%arg0: i32, %arg1: i32, %arg2: i32) -> (i32, i32) {
    %c0_i32 = arith.constant 0 : i32
    %c0_i32_0 = arith.constant 0 : i32
    return %c0_i32, %arg1 : i32, i32
  }
  func.func @transform_3(%arg0: i32, %arg1: i32, %arg2: i32) -> (i32, i32) {
    %c0_i32 = arith.constant 0 : i32
    return %arg0, %arg1 : i32, i32
  }
}

</mosaic_0001>

<llo_original>
// kernel: tpu_custom_call.1
$region0: #{tpu_custom_call.1}
  #allocation0 [shape = 'u32[]', space=smem, size = 0x4, offset = 0x4, fixed_abs, tag = 'smem constant byte address 0x4 - core index']
  #allocation1 [shape = 'u32[144,128]{1,0:T(1,128)}', space=vmem, size = 0x12000, scoped, tag = 'internal scratch']
  #allocation2 [shape = 'f32[16,32]{1,0:T(8,128)}', space=vmem, size = 0x2000, scoped, tag = 'scratch operand']
  %s0 = inlined_call_operand.hbm [shape: f32[16,32], index: 0, kind: input, shape index: {}]
  %s1 = inlined_call_operand.hbm [shape: f32[32,32], index: 1, kind: input, shape index: {}]
  %s2 = inlined_call_operand.vmem [shape: f32[1,32], index: 2, kind: input, shape index: {}]
  %s3 = inlined_call_operand.hbm [shape: f32[16,32], index: 3, kind: output, shape index: {}]
  %s4 = sld [smem:[#allocation0]]
  $region38: #{tpu_custom_call.1} parent=0
    _
  %s6 = ssub.s32 1, %s4
  %s7 = scalar_select 0, %s6, %s4
  $region1: #{tpu_custom_call.1} parent=0
    #allocation3 [shape = 'u8[8192]{0}', space=vmem, size = 0x2000, scoped, tag = 'input window, operand 0, single buffered']
    #allocation4 [shape = 's32[1]{0}', space=sflag, size = 0x4, scoped, tag = 'scoped memory for tpu_custom_call.1']
    #allocation5 [shape = 's32[1]{0}', space=sflag, size = 0x4, scoped, tag = 'scoped memory for tpu_custom_call.1']
    #allocation6 [shape = 'u8[16384]{0}', space=vmem, size = 0x4000, scoped, tag = 'input window, operand 1, single buffered']
    #allocation7 [shape = 's32[1]{0}', space=sflag, size = 0x4, scoped, tag = 'scoped memory for tpu_custom_call.1']
    #allocation8 [shape = 'u8[8192]{0}', space=vmem, size = 0x2000, scoped, tag = 'output window, operand 0, single buffered']
    %8 = vsyncpa [#allocation4], 0
    %9 = vsyncpa [#allocation7], 0
    %10 = vsyncpa [#allocation5], 0
    // Predicated region
    $region2: #{tpu_custom_call.1} parent=1 // pred_check
      _
    $region3: #{tpu_custom_call.1} parent=1 // pred_check_branch
      %12 = sbr.rel (0) target = $region5
    $region4: #{tpu_custom_call.1} parent=1 // pred_region
      %s14 = ssub.s32 256, 256
      %15 = vsyncadd [#allocation4], %s14
      %s16 = sshll.u32 [#allocation3], 4
      %s17 = int_to_ptr.vmem [resolvable:$true] %s16
      %22 = dma.hbm_to_vmem [thread:$0]  %s0, 256, %s17, [#allocation4], 128, 128, 8
    $region5: #{tpu_custom_call.1} parent=1 // pred_fallthru
      _
    // Predicated region
    $region6: #{tpu_custom_call.1} parent=1 // pred_check
      _
    $region7: #{tpu_custom_call.1} parent=1 // pred_check_branch
      %24 = sbr.rel (0) target = $region9
    $region8: #{tpu_custom_call.1} parent=1 // pred_region
      %s26 = ssub.s32 512, 512
      %27 = vsyncadd [#allocation7], %s26
      %s28 = sshll.u32 [#allocation6], 4
      %s29 = int_to_ptr.vmem [resolvable:$true] %s28
      %34 = dma.hbm_to_vmem [thread:$0]  %s1, 512, %s29, [#allocation7], 128, 128, 8
    $region9: #{tpu_custom_call.1} parent=1 // pred_fallthru
      _
    // Predicated region
    $region10: #{tpu_custom_call.1} parent=1 // pred_check
      _
    $region11: #{tpu_custom_call.1} parent=1 // pred_check_branch
      %36 = sbr.rel (0) target = $region13
    $region12: #{tpu_custom_call.1} parent=1 // pred_region
      _
    $region13: #{tpu_custom_call.1} parent=1 // pred_fallthru
      _
    // Predicated region
    $region14: #{tpu_custom_call.1} parent=1 // pred_check
      _
    $region15: #{tpu_custom_call.1} parent=1 // pred_check_branch
      %38 = sbr.rel (0) target = $region17
    $region16: #{tpu_custom_call.1} parent=1 // pred_region
      %39 = dma.done [#allocation4], 256
    $region17: #{tpu_custom_call.1} parent=1 // pred_fallthru
      _
    // Predicated region
    $region18: #{tpu_custom_call.1} parent=1 // pred_check
      _
    $region19: #{tpu_custom_call.1} parent=1 // pred_check_branch
      %41 = sbr.rel (0) target = $region21
    $region20: #{tpu_custom_call.1} parent=1 // pred_region
      %42 = dma.done [#allocation7], 512
    $region21: #{tpu_custom_call.1} parent=1 // pred_fallthru
      _
    %p43 = scmp.eq.s32.totalorder 0, 0
    // Predicated region
    $region22: #{tpu_custom_call.1} parent=1 // pred_check
      %p44 = pneg %p43
    $region23: #{tpu_custom_call.1} parent=1 // pred_check_branch
      %46 = sbr.rel (%p44) target = $region25
    $region24: #{tpu_custom_call.1} parent=1 // pred_region
      %vm47 = vcmask 261120
      %48 = vst.msk [vmem:[#allocation2] sm:$0xff] %vm47, 0.0
      %49 = vst.msk [vmem:[#allocation2 + $0x8] sm:$0xff] %vm47, 0.0
    $region25: #{tpu_custom_call.1} parent=1 // pred_fallthru
      _
    %v50 = vld [vmem:[#allocation2] sm:$0xff]
    %v51 = vld [vmem:[#allocation2 + $0x8] sm:$0xff]
    %v52 = vld [vmem:[#allocation3] sm:$0xff]
    %v53 = vld [vmem:[#allocation3 + $0x8] sm:$0xff]
    %v54 = vld [vmem:[#allocation6] sm:$0xff]
    %v55 = vld [vmem:[#allocation6 + $0x8] sm:$0xff]
    %v56 = vld [vmem:[#allocation6 + $0x10] sm:$0xff]
    %v57 = vld [vmem:[#allocation6 + $0x18] sm:$0xff]
    %vm58 = vcmask 261120
    %v60 = vsel %vm58, %v52, 0
    %v63 = vsel %vm58, %v53, 0
    %65 = vmatprep.subr.mxu0 0.0
    %66 = vmatpush1.msra.mxu0 %v54
    %67 = vmatprep.subr.mxu0 0.0
    %68 = vmatpush1.msra.mxu0 %v55
    %69 = vmatprep.subr.mxu0 0.0
    %70 = vmatpush1.msra.mxu0 %v56
    %71 = vmatprep.subr.mxu0 0.0
    %72 = vmatpush1.msra.mxu0 %v57
    %73 = vmatprep.subr.mxu0 0.0
    %74 = vmatpush1.msra.mxu0 0.0
    %75 = vmatprep.subr.mxu0 0.0
    %76 = vmatpush1.msra.mxu0 0.0
    %77 = vmatprep.subr.mxu0 0.0
    %78 = vmatpush1.msra.mxu0 0.0
    %79 = vmatprep.subr.mxu0 0.0
    %80 = vmatpush1.msra.mxu0 0.0
    %81 = vmatprep.subr.mxu0 0.0
    %82 = vmatpush1.msra.mxu0 0.0
    %83 = vmatprep.subr.mxu0 0.0
    %84 = vmatpush1.msra.mxu0 0.0
    %85 = vmatprep.subr.mxu0 0.0
    %86 = vmatpush1.msra.mxu0 0.0
    %87 = vmatprep.subr.mxu0 0.0
    %88 = vmatpush1.msra.mxu0 0.0
    %89 = vmatprep.subr.mxu0 0.0
    %90 = vmatpush1.msra.mxu0 0.0
    %91 = vmatprep.subr.mxu0 0.0
    %92 = vmatpush1.msra.mxu0 0.0
    %93 = vmatprep.subr.mxu0 0.0
    %94 = vmatpush1.msra.mxu0 0.0
    %95 = vmatprep.subr.mxu0 0.0
    %96 = vmatpush1.msra.mxu0 0.0
    %97 = vmatprep.subr.mxu0 0.0
    %98 = vmatpush1.msra.mxu0 0.0
    %99 = vmatprep.subr.mxu0 0.0
    %100 = vmatpush1.msra.mxu0 0.0
    %101 = vmatprep.subr.mxu0 0.0
    %102 = vmatpush1.msra.mxu0 0.0
    %103 = vmatprep.subr.mxu0 0.0
    %104 = vmatpush1.msra.mxu0 0.0
    %105 = vmatprep.subr.mxu0 0.0
    %106 = vmatpush1.msra.mxu0 0.0
    %107 = vmatprep.subr.mxu0 0.0
    %108 = vmatpush1.msra.mxu0 0.0
    %109 = vmatprep.subr.mxu0 0.0
    %110 = vmatpush1.msra.mxu0 0.0
    %111 = vmatprep.subr.mxu0 0.0
    %112 = vmatpush1.msra.mxu0 0.0
    %113 = vmatprep.subr.mxu0 0.0
    %114 = vmatpush1.msra.mxu0 0.0
    %115 = vmatprep.subr.mxu0 0.0
    %116 = vmatpush1.msra.mxu0 0.0
    %117 = vmatprep.subr.mxu0 0.0
    %118 = vmatpush1.msra.mxu0 0.0
    %119 = vmatprep.subr.mxu0 0.0
    %120 = vmatpush1.msra.mxu0 0.0
    %121 = vmatprep.subr.mxu0 0.0
    %122 = vmatpush1.msra.mxu0 0.0
    %123 = vmatprep.subr.mxu0 0.0
    %124 = vmatpush1.msra.mxu0 0.0
    %125 = vmatprep.subr.mxu0 0.0
    %126 = vmatpush1.msra.mxu0 0.0
    %127 = vmatprep.subr.mxu0 0.0
    %128 = vmatpush1.msra.mxu0 0.0
    %129 = vmatprep.mubr.f32.mxu0 0.0
    %130 = vmatmul.mubr.f32.gmra.mrb[0].mxu0 %v60
    %v131 = vpop.f32.mrb[0].mxu0
    %v132 = vadd.f32 0.0, %v131
    %v133 = vpop.f32.mrb[0].mxu0
    %134 = vmatprep.mubr.f32.mxu0 0.0
    %135 = vmatmul.mubr.f32.gmra.mrb[0].mxu0 %v63
    %v136 = vpop.f32.mrb[0].mxu0
    %v137 = vadd.f32 0.0, %v136
    %v138 = vpop.f32.mrb[0].mxu0
    %139 = vdwg.mxu0
    %v140 = vadd.f32 %v50, %v132
    %v141 = vadd.f32 %v51, %v137
    %142 = vst.msk [vmem:[#allocation2] sm:$0xff] %vm58, %v140
    %143 = vst.msk [vmem:[#allocation2 + $0x8] sm:$0xff] %vm58, %v141
    // Predicated region
    $region26: #{tpu_custom_call.1} parent=1 // pred_check
      %p144 = pneg %p43
    $region27: #{tpu_custom_call.1} parent=1 // pred_check_branch
      %146 = sbr.rel (%p144) target = $region29
    $region28: #{tpu_custom_call.1} parent=1 // pred_region
      %v147 = vld [vmem:[#allocation2] sm:$0xff]
      %v148 = vld [vmem:[#allocation2 + $0x8] sm:$0xff]
      %v149 = vld [vmem:[%s2] sm:$0x1]
      %v151 = vlaneseq
      %v152 = vshrl.u32 %v151, 7
      %v153 = vsub.s32 0, %v152
      %v154 = vrot.slane %v149, %v153
      %v156 = vadd.f32 %v147, %v154
      %v157 = vadd.f32 %v148, %v154
      %158 = vst.msk [vmem:[#allocation8] sm:$0xff] %vm58, %v156
      %159 = vst.msk [vmem:[#allocation8 + $0x8] sm:$0xff] %vm58, %v157
    $region29: #{tpu_custom_call.1} parent=1 // pred_fallthru
      _
    // Predicated region
    $region30: #{tpu_custom_call.1} parent=1 // pred_check
      _
    $region31: #{tpu_custom_call.1} parent=1 // pred_check_branch
      %161 = sbr.rel (0) target = $region33
    $region32: #{tpu_custom_call.1} parent=1 // pred_region
      %s163 = ssub.s32 256, 256
      %164 = vsyncadd [#allocation5], %s163
      %s165 = sshll.u32 [#allocation8], 4
      %s166 = int_to_ptr.vmem [resolvable:$true] %s165
      %171 = dma.vmem_to_hbm [thread:$0]  %s166, 256, %s3, [#allocation5], 128, 128, 8
    $region33: #{tpu_custom_call.1} parent=1 // pred_fallthru
      _
    // Predicated region
    $region34: #{tpu_custom_call.1} parent=1 // pred_check
      _
    $region35: #{tpu_custom_call.1} parent=1 // pred_check_branch
      %173 = sbr.rel (0) target = $region37
    $region36: #{tpu_custom_call.1} parent=1 // pred_region
      %174 = dma.done [#allocation5], 256
    $region37: #{tpu_custom_call.1} parent=1 // pred_fallthru
      _
    %175 = vsyncpa [#allocation4], 1
    %176 = vsyncpa [#allocation7], 1
    %177 = vsyncpa [#allocation5], 1

</llo_original>
